<compile_context>
chip_gen: v5e
topology: v5e:2x2
jax: 0.10.0
libtpu: 0.0.40
codegen_flags: <defaults>
</compile_context>

<pallas_src>
import functools

import jax
import jax.numpy as jnp
from jax.experimental import pallas as pl
from jax.experimental.pallas import tpu as pltpu

MAX_HIST = 10    # self_Atten keeps at most the last 10 GCN weight matrices
HIST_PAD = 16    # ring buffer padded to two clean (8,128) tiles
EPS = 1e-6       # self_Atten eps
HIGH = jax.lax.Precision.HIGHEST


# -----------------------------------------------------------------------------
# Standalone mat_GRU_gate kernel (the literal spec module):
#     out = activation(W @ x + U @ hidden + bias)
# -----------------------------------------------------------------------------
def _mat_gru_gate_kernel(x_ref, h_ref, w_ref, u_ref, b_ref, out_ref, *, activation):
    out_ref[...] = activation(
        jnp.dot(w_ref[...], x_ref[...], preferred_element_type=jnp.float32)
        + jnp.dot(u_ref[...], h_ref[...], preferred_element_type=jnp.float32)
        + b_ref[...])


def mat_gru_gate(x, hidden, W, U, bias, activation=jax.nn.sigmoid):
    rows, cols = bias.shape
    return pl.pallas_call(
        functools.partial(_mat_gru_gate_kernel, activation=activation),
        out_shape=jax.ShapeDtypeStruct((rows, cols), jnp.float32),
    )(x, hidden, W, U, bias)


# -----------------------------------------------------------------------------
# Kernel A: the whole GRCU weight recurrence, grid=(T,), flat lane-dense layout.
#   scratch: hist (HIST_PAD, fd) f32 -- ring buffer of flattened GCN weights
#            prev (1, fd)        f32 -- previous GCN weight (GRU state)
# -----------------------------------------------------------------------------
def _recurrence_kernel(init_ref, mcols_ref, p_ref, a1_ref, b1_ref,
                       kw_ref, kuzr_ref, kuh_ref, bcat_ref,
                       wseq_ref, hist_ref, prev_ref):
    t = pl.program_id(0)
    fd = prev_ref.shape[1]
    head = mcols_ref.shape[1]

    @pl.when(t == 0)
    def _init():
        hist_ref[...] = jnp.zeros_like(hist_ref)        # garbage VMEM could be NaN
        hist_ref[0:1, :] = init_ref[...]
        prev_ref[...] = init_ref[...]

    n_valid = jnp.minimum(t + 1, MAX_HIST)
    hist = hist_ref[...]                                           # (HIST_PAD, fd)

    # ---- attention over the weight history (trace trick, all heads at once) ----
    # score[i, h] = <K_h^T Q_h, W_i> / fd ; mcols = flattened K^T Q per head.
    # Default MXU precision here: softmax is shift-invariant and the /fd scaling
    # keeps the rounding contribution ~1e-5.
    scores = jnp.dot(hist, mcols_ref[...],
                     preferred_element_type=jnp.float32) * (1.0 / fd)
    slot_ids = jax.lax.broadcasted_iota(jnp.int32, scores.shape, 0)
    valid = slot_ids < n_valid                                     # rows >= 10 never valid
    scores = jnp.where(valid, scores, -1e30)
    smax = jnp.max(scores, axis=0, keepdims=True)
    e = jnp.where(valid, jnp.exp(scores - smax), 0.0)
    denom = jnp.sum(e, axis=0, keepdims=True)                      # >= 1
    sm = e * pl.reciprocal(denom)                                  # exact reciprocal

    # HIGHEST from here on: the custom LayerNorm below divides by
    # sqrt(sum(diff^2))/n which amplifies absolute rounding error ~45x and that
    # error compounds through the recurrence (2e-2 end-to-end check).
    wbar = jnp.dot(sm.T, hist, precision=HIGH,
                   preferred_element_type=jnp.float32)             # (head, fd)

    # proj = sum_h V_h @ Wbar_h @ WO_h, computed flat against the precomputed
    # kron(V_h^T, WO_h) operators: one lane-dense (1,128)x(128,128) matmul per
    # head, no per-head reshapes/relayouts anywhere.
    proj = jnp.zeros((1, fd), jnp.float32)
    for h in range(head):                                          # head is tiny/static
        proj = proj + jnp.dot(wbar[h:h + 1, :], p_ref[h * fd:(h + 1) * fd, :],
                              precision=HIGH, preferred_element_type=jnp.float32)

    # ---- module's custom LayerNorm + residual (dropout p=0 folded away) ----
    n = float(fd)
    s1 = jnp.sum(proj, keepdims=True)                              # (1, 1)
    s2 = jnp.sum(proj * proj, keepdims=True)                       # (1, 1)
    mean = s1 * (1.0 / n)
    # sum(diff^2) = sum(x^2) - sum(x)^2/n  (no cancellation risk: mean ~ 0 here)
    std = jnp.sqrt(jnp.maximum(s2 - s1 * mean, 0.0)) * (1.0 / n)   # module's (odd) std
    diff = proj - mean
    atten = proj + a1_ref[...] * diff * pl.reciprocal(std + EPS) + b1_ref[...]

    # ---- mat_GRU cell (mat_GRU_gate semantics), flat layout, batched gates ----
    #   W @ x      ->  x_flat @ kron(W^T, I_fout)
    prev = prev_ref[...]                                           # (1, fd)
    wx = jnp.dot(atten, kw_ref[...], precision=HIGH,
                 preferred_element_type=jnp.float32) + bcat_ref[...]   # (1, 3fd)
    uzr = jnp.dot(prev, kuzr_ref[...], precision=HIGH,
                  preferred_element_type=jnp.float32)                   # (1, 2fd)
    z_g = jax.nn.sigmoid(wx[:, 0:fd] + uzr[:, 0:fd])
    r_g = jax.nn.sigmoid(wx[:, fd:2 * fd] + uzr[:, fd:2 * fd])
    hcap = jnp.tanh(wx[:, 2 * fd:3 * fd]
                    + jnp.dot(r_g * prev, kuh_ref[...], precision=HIGH,
                              preferred_element_type=jnp.float32))
    new_w = (1.0 - z_g) * prev + z_g * hcap                        # (1, fd)

    # ---- write back: resident output row t, GRU state, ring-buffer slot ----
    wseq_ref[pl.ds(t, 1), :] = new_w
    prev_ref[...] = new_w
    hist_ref[pl.ds((t + 1) % MAX_HIST, 1), :] = new_w


# -----------------------------------------------------------------------------
# Kernel B: batched, K-tiled GCN propagation  relu(Ahat_t @ (X_t @ W_t))
#   grid = (T, row_tiles, k_tiles) = ("parallel", "parallel", "arbitrary")
#   f32 accumulator scratch; bf16 streamed inputs.
# -----------------------------------------------------------------------------
def _gcn_kernel(a_ref, x_ref, w_ref, out_ref, acc_ref):
    k = pl.program_id(2)

    @pl.when(k == 0)
    def _():
        acc_ref[...] = jnp.zeros_like(acc_ref)

    # X_tile @ W recomputed per row tile (~f_in/tm extra flops) so the row axis
    # stays fully parallel and no scratch scales with N.
    xw = jnp.dot(x_ref[...], w_ref[...], preferred_element_type=jnp.float32)
    acc_ref[...] += jnp.dot(a_ref[...], xw.astype(a_ref.dtype),
                            preferred_element_type=jnp.float32)

    @pl.when(k == pl.num_programs(2) - 1)
    def _():
        out_ref[...] = jnp.maximum(acc_ref[...], 0.0).astype(out_ref.dtype)


def _default_vmem_limit():
    """~7/8 of physical VMEM, capped at 112 MiB.

    v5e/v6e (128 MiB physical) -> 112 MiB; v7x (64 MiB) -> 56 MiB.
    Fallback (56 MiB) is safe on every generation.
    """
    try:
        cap = pltpu.get_tpu_info().vmem_capacity_bytes
    except Exception:
        cap = 64 << 20
    return int(min((cap * 7) // 8, 112 << 20))


def _pick_gcn_tiles(N, elt_bytes, vmem_limit_bytes):
    """Pick (row_tile, k_tile) for the GCN kernel.

    The double-buffered A tile (2*tm*tk*elt bytes) dominates VMEM; ~60% of the
    scoped limit is budgeted for it so X / W / output / accumulator fit easily.
    Both tiles are chosen to divide N exactly (ragged K tiles would accumulate
    padded garbage).
    """
    if N % 128 != 0:
        return N, N                     # small / ragged N (demo path): full blocks
    budget = (vmem_limit_bytes * 6) // 10

    def largest_dividing_tile(cap):
        t = max(128, min((cap // 128) * 128, N))
        while t > 128 and N % t != 0:
            t -= 128
        return t

    tk = largest_dividing_tile(2048)
    tm = largest_dividing_tile(budget // (2 * tk * elt_bytes))
    return tm, tk


def gcn_propagate_all(A_stack, X_stack, w_seq, *, row_tile=None, k_tile=None,
                      compute_dtype=jnp.bfloat16, vmem_limit_bytes=None):
    T, N, _ = A_stack.shape
    f_in = X_stack.shape[-1]
    f_out = w_seq.shape[-1]
    if vmem_limit_bytes is None:
        vmem_limit_bytes = _default_vmem_limit()
    elt = jnp.dtype(compute_dtype).itemsize
    tm_d, tk_d = _pick_gcn_tiles(N, elt, vmem_limit_bytes)
    tm = tm_d if row_tile is None else min(row_tile, N)
    tk = tk_d if k_tile is None else min(k_tile, N)

    # bf16 halves the dominant A stream (the kernel is HBM-bound).  Ideally the
    # caller produces A/X in bf16 upstream so these casts are free.
    A = A_stack.astype(compute_dtype)
    X = X_stack.astype(compute_dtype)
    W = w_seq.astype(compute_dtype)

    grid = (T, pl.cdiv(N, tm), pl.cdiv(N, tk))
    return pl.pallas_call(
        _gcn_kernel,
        grid_spec=pltpu.PrefetchScalarGridSpec(
            num_scalar_prefetch=0,
            grid=grid,
            in_specs=[
                pl.BlockSpec((None, tm, tk), lambda t, r, k: (t, r, k)),      # Ahat
                pl.BlockSpec((None, tk, f_in), lambda t, r, k: (t, k, 0)),    # X
                pl.BlockSpec((None, f_in, f_out), lambda t, r, k: (t, 0, 0)), # W_t
            ],
            out_specs=pl.BlockSpec((None, tm, f_out), lambda t, r, k: (t, r, 0)),
            scratch_shapes=[pltpu.VMEM((tm, f_out), jnp.float32)],
        ),
        out_shape=jax.ShapeDtypeStruct((T, N, f_out), jnp.float32),
        compiler_params=pltpu.CompilerParams(
            dimension_semantics=("parallel", "parallel", "arbitrary"),
            vmem_limit_bytes=int(vmem_limit_bytes)),
    )(A, X, W)


# -----------------------------------------------------------------------------
# Full GRCU forward: 2 pallas_calls total (fused recurrence + batched GCN).
# -----------------------------------------------------------------------------
def _grcu_forward_impl(params, A_stack, X_stack):
    f_in, f_out = params["gcn_init_w"].shape
    head = params["keys"].shape[0]
    fd = f_in * f_out
    T = A_stack.shape[0]

    # ---- loop-invariant hoists (tiny, traced under jit) ----
    # score_{i,h} = <K_h^T Q_h, W_i>/fd  -> flattened columns of K^T Q per head
    ktq = jnp.einsum("hki,hko->hio", params["keys"], params["queries"],
                     precision=HIGH)                        # (head, f_in, f_out)
    mcols = ktq.reshape(head, fd).T                         # (fd, head)
    # per-head projection operator: vec_r(V_h Wbar WO_h) = vec_r(Wbar) @ kron(V_h^T, WO_h)
    P = jnp.concatenate(
        [jnp.kron(params["values"][h].T, params["w_o"][h]) for h in range(head)],
        axis=0)                                             # (head*fd, fd)
    a1f = params["a1"].reshape(1, fd)
    b1f = params["b1"].reshape(1, fd)

    gru = params["gru"]
    eye = jnp.eye(f_out, dtype=jnp.float32)
    # mat_GRU_gate's  W @ x  in flat layout:  x_flat @ kron(W^T, I_fout)
    kw = jnp.concatenate([jnp.kron(gru[g]["W"].T, eye)
                          for g in ("update", "reset", "htilda")], axis=1)    # (fd, 3fd)
    kuzr = jnp.concatenate([jnp.kron(gru[g]["U"].T, eye)
                            for g in ("update", "reset")], axis=1)            # (fd, 2fd)
    kuh = jnp.kron(gru["htilda"]["U"].T, eye)                                 # (fd, fd)
    bcat = jnp.concatenate([gru[g]["bias"].reshape(1, fd)
                            for g in ("update", "reset", "htilda")], axis=1)  # (1, 3fd)
    init_flat = params["gcn_init_w"].reshape(1, fd)

    wseq_flat = pl.pallas_call(
        _recurrence_kernel,
        grid_spec=pltpu.PrefetchScalarGridSpec(
            num_scalar_prefetch=0,
            grid=(T,),
            in_specs=[
                pl.BlockSpec((1, fd), lambda t: (0, 0)),           # init weight (flat)
                pl.BlockSpec((fd, head), lambda t: (0, 0)),        # K^T Q columns
                pl.BlockSpec((head * fd, fd), lambda t: (0, 0)),   # attention proj op
                pl.BlockSpec((1, fd), lambda t: (0, 0)),           # a1 (flat)
                pl.BlockSpec((1, fd), lambda t: (0, 0)),           # b1 (flat)
                pl.BlockSpec((fd, 3 * fd), lambda t: (0, 0)),      # kron [Wz|Wr|Wh]
                pl.BlockSpec((fd, 2 * fd), lambda t: (0, 0)),      # kron [Uz|Ur]
                pl.BlockSpec((fd, fd), lambda t: (0, 0)),          # kron Uh
                pl.BlockSpec((1, 3 * fd), lambda t: (0, 0)),       # [bz|br|bh] (flat)
            ],
            # Constant block index across the whole grid: the (T, fd) output stays
            # resident in VMEM for all T steps, one HBM writeback at the end.
            out_specs=pl.BlockSpec((T, fd), lambda t: (0, 0)),
            scratch_shapes=[
                pltpu.VMEM((HIST_PAD, fd), jnp.float32),   # weight-history ring buffer
                pltpu.VMEM((1, fd), jnp.float32),          # GRU state (prev weight)
            ],
        ),
        out_shape=jax.ShapeDtypeStruct((T, fd), jnp.float32),
        compiler_params=pltpu.CompilerParams(dimension_semantics=("arbitrary",)),
    )(init_flat, mcols, P, a1f, b1f, kw, kuzr, kuh, bcat)

    w_seq = wseq_flat.reshape(T, f_in, f_out)
    out = gcn_propagate_all(A_stack, X_stack, w_seq)
    return out, w_seq


grcu_forward = jax.jit(_grcu_forward_impl)


# -----------------------------------------------------------------------------
# Pure-JAX reference (full f32 matmuls) for correctness checking.
# -----------------------------------------------------------------------------
def grcu_forward_ref(params, A_stack, X_stack):
    with jax.default_matmul_precision("highest"):
        f_in, f_out = params["gcn_init_w"].shape
        denom = float(f_in * f_out)
        head = params["keys"].shape[0]
        hist = [params["gcn_init_w"]]
        outs = []
        for t in range(A_stack.shape[0]):
            recent = hist[-MAX_HIST:]
            head_vals = []
            for h in range(head):
                q, k, v = params["queries"][h], params["keys"][h], params["values"][h]
                scores = jnp.stack([jnp.sum(q * (k @ w)) / denom for w in recent])
                sm = jax.nn.softmax(scores, axis=0)
                head_vals.append(sum(sm[i] * (v @ recent[i]) for i in range(len(recent))))
            proj = sum(head_vals[h] @ params["w_o"][h] for h in range(head))
            n = float(f_in * f_out)
            mean = jnp.sum(proj) / n
            diff = proj - mean
            std = jnp.sqrt(jnp.sum(diff * diff)) / n
            atten = proj + params["a1"] * diff / (std + EPS) + params["b1"]

            gru = params["gru"]
            prev = hist[-1]

            def gate(g, h_in, act):
                return act(gru[g]["W"] @ atten + gru[g]["U"] @ h_in + gru[g]["bias"])

            z = gate("update", prev, jax.nn.sigmoid)
            r = gate("reset", prev, jax.nn.sigmoid)
            hcap = gate("htilda", r * prev, jnp.tanh)
            new_w = (1.0 - z) * prev + z * hcap
            hist.append(new_w)
            outs.append(jnp.maximum(A_stack[t] @ (X_stack[t] @ new_w), 0.0))
        return jnp.stack(outs), jnp.stack(hist[1:])


# -----------------------------------------------------------------------------
# Deterministic parameter initialization (mirrors the module's __init__ shapes)
# -----------------------------------------------------------------------------
def init_params(rng, f_in, f_out, head):
    orth = jax.nn.initializers.orthogonal()
    ks = iter(jax.random.split(rng, 32))
    keys_p = jnp.stack([orth(next(ks), (f_in, f_in), jnp.float32) for _ in range(head)])
    queries_p = jnp.stack([orth(next(ks), (f_in, f_out), jnp.float32) for _ in range(head)])
    values_p = jnp.stack([orth(next(ks), (f_in, f_in), jnp.float32) for _ in range(head)])
    if head != 1:
        w_o = orth(next(ks), (head * f_out, f_out), jnp.float32).reshape(head, f_out, f_out)
    else:
        w_o = jnp.eye(f_out, dtype=jnp.float32)[None]
    a1 = jnp.ones((f_in, f_out), jnp.float32)
    b1 = jnp.zeros((f_in, f_out), jnp.float32)
    gru = {}
    for g in ("update", "reset", "htilda"):
        gru[g] = {
            "W": orth(next(ks), (f_in, f_in), jnp.float32),
            "U": orth(next(ks), (f_in, f_in), jnp.float32),
            "bias": jnp.zeros((f_in, f_out), jnp.float32),
        }
    gcn_init_w = orth(next(ks), (f_in, f_out), jnp.float32)
    return dict(keys=keys_p, queries=queries_p, values=values_p, w_o=w_o,
                a1=a1, b1=b1, gru=gru, gcn_init_w=gcn_init_w)


# TODO(synk): self_Atten.PositionalEncoding in the source file is dead/broken code
#             (uses nonexistent math.exe, never called from forward) — not ported.

if __name__ == "__main__":
    F_IN, F_OUT, HEAD = 16, 8, 2
    N_NODES, SEQ_LEN = 32, 12          # SEQ_LEN > MAX_HIST exercises the ring-buffer wrap

    root = jax.random.PRNGKey(0)
    k_params, k_a, k_x, k_g = jax.random.split(root, 4)
    params = init_params(k_params, F_IN, F_OUT, HEAD)

    A_stack = jax.random.normal(k_a, (SEQ_LEN, N_NODES, N_NODES), jnp.float32) / N_NODES
    X_stack = jax.random.normal(k_x, (SEQ_LEN, N_NODES, F_IN), jnp.float32)

    # --- standalone mat_GRU_gate kernel (the literal spec module) ---
    gk = jax.random.split(k_g, 4)
    W = jax.nn.initializers.orthogonal()(gk[0], (F_IN, F_IN), jnp.float32)
    U = jax.nn.initializers.orthogonal()(gk[1], (F_IN, F_IN), jnp.float32)
    bias = jnp.zeros((F_IN, F_OUT), jnp.float32)
    x_g = jax.random.normal(gk[2], (F_IN, F_OUT), jnp.float32)
    h_g = jax.random.normal(gk[3], (F_IN, F_OUT), jnp.float32)
    gate_out = jax.block_until_ready(mat_gru_gate(x_g, h_g, W, U, bias))
    gate_ref = jax.nn.sigmoid(W @ x_g + U @ h_g + bias)
    assert bool(jnp.allclose(gate_out, gate_ref, rtol=1e-2, atol=1e-2)), \
        float(jnp.max(jnp.abs(gate_out - gate_ref)))

    # --- full GRCU forward: fused recurrence + K-tiled batched GCN propagation ---
    out, w_seq = grcu_forward(params, A_stack, X_stack)
    out = jax.block_until_ready(out)
    w_seq = jax.block_until_ready(w_seq)

    ref_out, ref_w = grcu_forward_ref(params, A_stack, X_stack)
    assert out.shape == (SEQ_LEN, N_NODES, F_OUT)
    assert bool(jnp.all(jnp.isfinite(out)))
    assert bool(jnp.allclose(w_seq, ref_w, rtol=2e-2, atol=2e-2)), \
        float(jnp.max(jnp.abs(w_seq - ref_w)))
    assert bool(jnp.allclose(out, ref_out, rtol=2e-2, atol=2e-2)), \
        float(jnp.max(jnp.abs(out - ref_out)))

    print("KERNEL_OK")
</pallas_src>

<mosaic_0001>
module attributes {stable_mosaic.version = 11 : i64} {
  func.func @_mat_gru_gate_kernel(%arg0: memref<16x8xf32, #tpu.memory_space<vmem>>, %arg1: memref<16x8xf32, #tpu.memory_space<vmem>>, %arg2: memref<16x16xf32, #tpu.memory_space<vmem>>, %arg3: memref<16x16xf32, #tpu.memory_space<vmem>>, %arg4: memref<16x8xf32, #tpu.memory_space<vmem>>, %arg5: memref<16x8xf32, #tpu.memory_space<vmem>>) attributes {dimension_semantics = [], scalar_prefetch = 0 : i64, scratch_operands = 0 : i64, tpu.core_type = #tpu.core_type<tc>} {
    %c0 = arith.constant 0 : index
    %c0_0 = arith.constant 0 : index
    %0 = vector.load %arg2[%c0, %c0_0] : memref<16x16xf32, #tpu.memory_space<vmem>>, vector<16x16xf32>
    %c0_1 = arith.constant 0 : index
    %c0_2 = arith.constant 0 : index
    %1 = vector.load %arg0[%c0_1, %c0_2] : memref<16x8xf32, #tpu.memory_space<vmem>>, vector<16x8xf32>
    %cst = arith.constant dense<0.000000e+00> : vector<16x8xf32>
    %2 = tpu.matmul %0, %1, %cst {dimension_numbers = #tpu.dot_dimension_numbers<[1], [0], [0], [1], [0, 0, 1, 1], [], []>} : vector<16x16xf32>, vector<16x8xf32>, vector<16x8xf32> -> vector<16x8xf32>
    %c0_3 = arith.constant 0 : index
    %c0_4 = arith.constant 0 : index
    %3 = vector.load %arg3[%c0_3, %c0_4] : memref<16x16xf32, #tpu.memory_space<vmem>>, vector<16x16xf32>
    %c0_5 = arith.constant 0 : index
    %c0_6 = arith.constant 0 : index
    %4 = vector.load %arg1[%c0_5, %c0_6] : memref<16x8xf32, #tpu.memory_space<vmem>>, vector<16x8xf32>
    %cst_7 = arith.constant dense<0.000000e+00> : vector<16x8xf32>
    %5 = tpu.matmul %3, %4, %cst_7 {dimension_numbers = #tpu.dot_dimension_numbers<[1], [0], [0], [1], [0, 0, 1, 1], [], []>} : vector<16x16xf32>, vector<16x8xf32>, vector<16x8xf32> -> vector<16x8xf32>
    %6 = arith.addf %2, %5 : vector<16x8xf32>
    %c0_8 = arith.constant 0 : index
    %c0_9 = arith.constant 0 : index
    %7 = vector.load %arg4[%c0_8, %c0_9] : memref<16x8xf32, #tpu.memory_space<vmem>>, vector<16x8xf32>
    %8 = arith.addf %6, %7 : vector<16x8xf32>
    %9 = arith.negf %8 : vector<16x8xf32>
    %10 = math.exp %9 : vector<16x8xf32>
    %cst_10 = arith.constant 1.000000e+00 : f32
    %11 = vector.broadcast %cst_10 : f32 to vector<16x8xf32>
    %12 = arith.addf %11, %10 : vector<16x8xf32>
    %13 = arith.divf %11, %12 : vector<16x8xf32>
    %c0_11 = arith.constant 0 : index
    %c0_12 = arith.constant 0 : index
    %14 = vector.load %arg5[%c0_11, %c0_12] : memref<16x8xf32, #tpu.memory_space<vmem>>, vector<16x8xf32>
    tpu.vector_store %arg5[%c0_11, %c0_12], %13 {strides = array<i32>} : memref<16x8xf32, #tpu.memory_space<vmem>>, vector<16x8xf32>,
    return
  }
}

</mosaic_0001>

<llo_original>
// kernel: tpu_custom_call.1
$region0: #{tpu_custom_call.1}
  #allocation0 [shape = 'u32[]', space=smem, size = 0x4, offset = 0x4, fixed_abs, tag = 'smem constant byte address 0x4 - core index']
  #allocation1 [shape = 'u32[72,128]{1,0:T(1,128)}', space=vmem, size = 0x9000, scoped, tag = 'internal scratch']
  %s0 = inlined_call_operand.vmem [shape: f32[16,8], index: 0, kind: input, shape index: {}]
  %s1 = inlined_call_operand.vmem [shape: f32[16,8], index: 1, kind: input, shape index: {}]
  %s2 = inlined_call_operand.vmem [shape: f32[16,16], index: 2, kind: input, shape index: {}]
  %s3 = inlined_call_operand.vmem [shape: f32[16,16], index: 3, kind: input, shape index: {}]
  %s4 = inlined_call_operand.vmem [shape: f32[16,8], index: 4, kind: input, shape index: {}]
  %s5 = inlined_call_operand.vmem [shape: f32[16,8], index: 5, kind: output, shape index: {}]
  %s6 = sld [smem:[#allocation0]]
  $region30: #{tpu_custom_call.1} parent=0
    _
  %s8 = ssub.s32 1, %s6
  %s9 = scalar_select 0, %s8, %s6
  // Predicated region
  $region2: #{tpu_custom_call.1} parent=0 // pred_check
    _
  $region3: #{tpu_custom_call.1} parent=0 // pred_check_branch
    %11 = sbr.rel (0) target = $region5
  $region4: #{tpu_custom_call.1} parent=0 // pred_region
    _
  $region5: #{tpu_custom_call.1} parent=0 // pred_fallthru
    _
  // Predicated region
  $region6: #{tpu_custom_call.1} parent=0 // pred_check
    _
  $region7: #{tpu_custom_call.1} parent=0 // pred_check_branch
    %13 = sbr.rel (0) target = $region9
  $region8: #{tpu_custom_call.1} parent=0 // pred_region
    _
  $region9: #{tpu_custom_call.1} parent=0 // pred_fallthru
    _
  // Predicated region
  $region10: #{tpu_custom_call.1} parent=0 // pred_check
    _
  $region11: #{tpu_custom_call.1} parent=0 // pred_check_branch
    %15 = sbr.rel (0) target = $region13
  $region12: #{tpu_custom_call.1} parent=0 // pred_region
    _
  $region13: #{tpu_custom_call.1} parent=0 // pred_fallthru
    _
  // Predicated region
  $region14: #{tpu_custom_call.1} parent=0 // pred_check
    _
  $region15: #{tpu_custom_call.1} parent=0 // pred_check_branch
    %17 = sbr.rel (0) target = $region17
  $region16: #{tpu_custom_call.1} parent=0 // pred_region
    _
  $region17: #{tpu_custom_call.1} parent=0 // pred_fallthru
    _
  // Predicated region
  $region18: #{tpu_custom_call.1} parent=0 // pred_check
    _
  $region19: #{tpu_custom_call.1} parent=0 // pred_check_branch
    %19 = sbr.rel (0) target = $region21
  $region20: #{tpu_custom_call.1} parent=0 // pred_region
    _
  $region21: #{tpu_custom_call.1} parent=0 // pred_fallthru
    _
  %v20 = vld [vmem:[%s2] sm:$0xff]
  %v21 = vld [vmem:[%s2 + $0x8] sm:$0xff]
  %v22 = vld [vmem:[%s0] sm:$0xff]
  %v23 = vld [vmem:[%s0 + $0x8] sm:$0xff]
  %v24 = vld [vmem:[%s3] sm:$0xff]
  %v25 = vld [vmem:[%s3 + $0x8] sm:$0xff]
  %v26 = vld [vmem:[%s1] sm:$0xff]
  %v27 = vld [vmem:[%s1 + $0x8] sm:$0xff]
  %vm28 = vcmask 130048
  %v30 = vsel %vm28, %v24, 0
  %v33 = vsel %vm28, %v25, 0
  %35 = vmatpush.msra.mxu0 0.0
  %36 = vmatpush.msra.mxu0 0.0
  %37 = vmatpush.msra.mxu0 0.0
  %38 = vmatpush.msra.mxu0 0.0
  %39 = vmatpush.msra.mxu0 0.0
  %40 = vmatpush.msra.mxu0 0.0
  %41 = vmatpush.msra.mxu0 0.0
  %42 = vmatpush.msra.mxu0 0.0
  %43 = vmatpush.msra.mxu0 0.0
  %44 = vmatpush.msra.mxu0 0.0
  %45 = vmatpush.msra.mxu0 0.0
  %46 = vmatpush.msra.mxu0 0.0
  %47 = vmatpush.msra.mxu0 0.0
  %48 = vmatpush.msra.mxu0 0.0
  %49 = vmatpush.msra.mxu0 %v27
  %50 = vmatpush.msra.mxu0 %v26
  %51 = vmatmul.f32.gmra.mxu0 %v30
  %v52 = vpop.f32.mrf.mxu0
  %v53 = vadd.f32 0.0, %v52
  %54 = vmatmul.f32.gmra.mxu0 %v33
  %v55 = vpop.f32.mrf.mxu0
  %v56 = vadd.f32 0.0, %v55
  %57 = vdwg.mxu0
  %v59 = vsel %vm28, %v20, 0
  %v62 = vsel %vm28, %v21, 0
  %64 = vmatpush.msra.mxu0 0.0
  %65 = vmatpush.msra.mxu0 0.0
  %66 = vmatpush.msra.mxu0 0.0
  %67 = vmatpush.msra.mxu0 0.0
  %68 = vmatpush.msra.mxu0 0.0
  %69 = vmatpush.msra.mxu0 0.0
  %70 = vmatpush.msra.mxu0 0.0
  %71 = vmatpush.msra.mxu0 0.0
  %72 = vmatpush.msra.mxu0 0.0
  %73 = vmatpush.msra.mxu0 0.0
  %74 = vmatpush.msra.mxu0 0.0
  %75 = vmatpush.msra.mxu0 0.0
  %76 = vmatpush.msra.mxu0 0.0
  %77 = vmatpush.msra.mxu0 0.0
  %78 = vmatpush.msra.mxu0 %v23
  %79 = vmatpush.msra.mxu0 %v22
  %80 = vmatmul.f32.gmra.mxu0 %v59
  %v81 = vpop.f32.mrf.mxu0
  %v82 = vadd.f32 %v53, %v81
  %83 = vmatmul.f32.gmra.mxu0 %v62
  %v84 = vpop.f32.mrf.mxu0
  %v85 = vadd.f32 %v56, %v84
  %86 = vdwg.mxu0
  %v87 = vld [vmem:[%s4] sm:$0xff]
  %v88 = vld [vmem:[%s4 + $0x8] sm:$0xff]
  %v89 = vadd.f32 %v82, %v87
  %v90 = vadd.f32 %v85, %v88
  %v91 = vxor.u32 %v89, 2147483648
  %v92 = vxor.u32 %v90, 2147483648
  %v93 = vmul.f32 %v91, 1.442695
  %v94 = vpow.pop %v93
  %v95 = vmul.f32 %v92, 1.442695
  %v96 = vpow.pop %v95
  %v97 = vadd.f32 %v94, 1.0
  %v98 = vadd.f32 %v96, 1.0
  %v99 = vrcp.pop %v97
  %v100 = vmul.f32 %v97, %v99
  %v101 = vsub.f32 1.0, %v100
  %v102 = vmul.f32 %v99, %v101
  %v103 = vadd.f32 %v99, %v102
  %vm104 = vweird.f32 %v97
  %vm105 = vweird.f32 %v99
  %vm106 = vmor %vm104, %vm105
  %v107 = vsel %vm106, %v99, %v103
  %v108 = vand.u32 2147483647, %v97
  %vm109 = vcmp.eq.f32.partialorder %v108, 8.507059e+37
  %v110 = vand.u32 %v97, 2147483648
  %v111 = vor.u32 1.1754944e-38, %v110
  %v112 = vsel %vm109, %v111, %v107
  %v113 = vmul.f32 1.0, %v112
  %v114 = vrcp.pop %v98
  %v115 = vmul.f32 %v98, %v114
  %v116 = vsub.f32 1.0, %v115
  %v117 = vmul.f32 %v114, %v116
  %v118 = vadd.f32 %v114, %v117
  %vm119 = vweird.f32 %v98
  %vm120 = vweird.f32 %v114
  %vm121 = vmor %vm119, %vm120
  %v122 = vsel %vm121, %v114, %v118
  %v123 = vand.u32 2147483647, %v98
  %vm124 = vcmp.eq.f32.partialorder %v123, 8.507059e+37
  %v125 = vand.u32 %v98, 2147483648
  %v126 = vor.u32 1.1754944e-38, %v125
  %v127 = vsel %vm124, %v126, %v122
  %v128 = vmul.f32 1.0, %v127
  %vm129 = vcmask 64512
  %130 = vst.msk [vmem:[%s5] sm:$0xff] %vm129, %v113
  %131 = vst.msk [vmem:[%s5 + $0x8] sm:$0xff] %vm129, %v128
  // Predicated region
  $region22: #{tpu_custom_call.1} parent=0 // pred_check
    _
  $region23: #{tpu_custom_call.1} parent=0 // pred_check_branch
    %133 = sbr.rel (0) target = $region25
  $region24: #{tpu_custom_call.1} parent=0 // pred_region
    _
  $region25: #{tpu_custom_call.1} parent=0 // pred_fallthru
    _
  // Predicated region
  $region26: #{tpu_custom_call.1} parent=0 // pred_check
    _
  $region27: #{tpu_custom_call.1} parent=0 // pred_check_branch
    %135 = sbr.rel (0) target = $region29
  $region28: #{tpu_custom_call.1} parent=0 // pred_region
    _
  $region29: #{tpu_custom_call.1} parent=0 // pred_fallthru
    _

</llo_original>
